<compile_context>
chip_gen: v6e
topology: v6e:2x2x1
jax: 0.10.0
libtpu: 0.0.40
codegen_flags: <defaults>
</compile_context>

<pallas_src>
import functools

import jax
import jax.numpy as jnp
from jax.experimental import pallas as pl
from jax.experimental.pallas import tpu as pltpu


def _shift_offsets(stride):
    s = stride
    return ((-s, 0), (s, 0), (0, -s), (0, s),
            (s, s), (s, -s), (-s, s), (-s, -s))


def _shift8_kernel(x_ref, m_ref, o_ref, *, groups, h, w, stride):
    """x_ref: (1, 8*groups, h*w); m_ref: (8, h*w) 0/1 masks; o_ref: (1, 8*groups, h*w)."""
    L = h * w
    for k, (dr, dc) in enumerate(_shift_offsets(stride)):
        lo = k * groups
        xk = x_ref[0, lo:lo + groups, :]                       # (groups, L)
        # out[p] = x[p + dr*w + dc]  ==  circular lane-roll by -(dr*w+dc), then mask
        # out the wrapped / out-of-image taps (zero fill, as in F.pad constant mode).
        shift = (-(dr * w + dc)) % L                           # static Python int
        rolled = pltpu.roll(xk, shift=shift, axis=1) if shift else xk
        valid = m_ref[k:k + 1, :] > 0.5                        # (1, L) bool, broadcasts
        o_ref[0, lo:lo + groups, :] = jnp.where(valid, rolled, 0.0).astype(o_ref.dtype)


def _boundary_masks(h, w, stride):
    """(8, h*w) float32 0/1 validity masks, one row per shift direction."""
    ii = jnp.arange(h)[:, None]
    jj = jnp.arange(w)[None, :]
    rows = []
    for dr, dc in _shift_offsets(stride):
        valid = ((ii + dr >= 0) & (ii + dr < h) &
                 (jj + dc >= 0) & (jj + dc < w))
        rows.append(valid.reshape(h * w))
    return jnp.stack(rows).astype(jnp.float32)


def shift8_forward(x, groups=4, stride=1, mode="constant"):
    """Pallas TPU implementation of Shift8.forward (NCHW in, NCHW out)."""
    if mode != "constant":
        # TODO(synk): only the module's default zero-pad mode of F.pad is implemented.
        raise NotImplementedError("Shift8 Pallas kernel supports mode='constant' only")
    b, c, h, w = x.shape
    assert c == groups * 8, "Shift8 requires c == 8 * groups"
    L = h * w

    x_flat = x.reshape(b, c, L)
    masks = _boundary_masks(h, w, stride)

    out_flat = pl.pallas_call(
        functools.partial(_shift8_kernel, groups=groups, h=h, w=w, stride=stride),
        out_shape=jax.ShapeDtypeStruct((b, c, L), x.dtype),
        grid_spec=pltpu.PrefetchScalarGridSpec(
            num_scalar_prefetch=0,
            grid=(b,),
            in_specs=[
                pl.BlockSpec((1, c, L), lambda i: (i, 0, 0)),   # per-batch slab
                pl.BlockSpec((8, L), lambda i: (0, 0)),          # grid-invariant masks
            ],
            out_specs=pl.BlockSpec((1, c, L), lambda i: (i, 0, 0)),
        ),
        compiler_params=pltpu.CompilerParams(
            dimension_semantics=("parallel",)),
    )(x_flat, masks)
    return out_flat.reshape(b, c, h, w)


# ----------------------------------------------------------------------------
# Pure-JAX reference (direct transcription of the PyTorch forward) for checking.
# ----------------------------------------------------------------------------
def shift8_reference(x, groups=4, stride=1):
    b, c, h, w = x.shape
    s = stride
    pad_x = jnp.pad(x, ((0, 0), (0, 0), (s, s), (s, s)))
    windows = [(0, s), (2 * s, s), (s, 0), (s, 2 * s),
               (2 * s, 2 * s), (2 * s, 0), (0, 2 * s), (0, 0)]
    parts = []
    for k, (r0, c0) in enumerate(windows):
        parts.append(pad_x[:, k * groups:(k + 1) * groups, r0:r0 + h, c0:c0 + w])
    return jnp.concatenate(parts, axis=1)


if __name__ == "__main__":
    key = jax.random.PRNGKey(0)
    b, groups, h, w = 2, 4, 16, 16
    c = groups * 8                                  # module requires c == 8 * groups
    x = jax.random.normal(key, (b, c, h, w), jnp.float32)

    for stride in (1, 2):
        out = jax.block_until_ready(shift8_forward(x, groups=groups, stride=stride))
        ref = shift8_reference(x, groups=groups, stride=stride)
        assert out.shape == (b, c, h, w)
        assert jnp.allclose(out, ref, rtol=0.0, atol=0.0), f"mismatch at stride={stride}"

    print("KERNEL_OK")
</pallas_src>

<mosaic_0001>
module attributes {stable_mosaic.version = 11 : i64} {
  func.func @_shift8_kernel(%arg0: i32, %arg1: memref<1x32x256xf32, #tpu.memory_space<vmem>>, %arg2: memref<8x256xf32, #tpu.memory_space<vmem>>, %arg3: memref<1x32x256xf32, #tpu.memory_space<vmem>>) attributes {dimension_semantics = [#tpu.dimension_semantics<parallel>], iteration_bounds = array<i64: 2>, scalar_prefetch = 0 : i64, scratch_operands = 0 : i64, tpu.core_type = #tpu.core_type<tc>, window_params = [{transform_indices = @transform_0, window_bounds = array<i64: 1, 32, 256>}, {pipeline_mode = #tpu.pipeline_mode<synchronous>, transform_indices = @transform_1, window_bounds = array<i64: 8, 256>}, {transform_indices = @transform_2, window_bounds = array<i64: 1, 32, 256>}]} {
    %c0 = arith.constant 0 : index
    %c0_0 = arith.constant 0 : index
    %c0_1 = arith.constant 0 : index
    %0 = vector.load %arg1[%c0, %c0_0, %c0_1] : memref<1x32x256xf32, #tpu.memory_space<vmem>>, vector<1x4x256xf32>
    %1 = vector.shape_cast %0 : vector<1x4x256xf32> to vector<4x256xf32>
    %c16_i32 = arith.constant 16 : i32
    %2 = tpu.dynamic_rotate %1 by %c16_i32 dim 1 : vector<4x256xf32>, i32 -> vector<4x256xf32>
    %c0_2 = arith.constant 0 : index
    %c0_3 = arith.constant 0 : index
    %3 = vector.load %arg2[%c0_2, %c0_3] : memref<8x256xf32, #tpu.memory_space<vmem>>, vector<1x256xf32>
    %cst = arith.constant 5.000000e-01 : f32
    %4 = vector.broadcast %cst : f32 to vector<1x256xf32>
    %5 = arith.cmpf ogt, %3, %4 : vector<1x256xf32>
    %cst_4 = arith.constant 0.000000e+00 : f32
    %6 = vector.shape_cast %5 : vector<1x256xi1> to vector<1x256xi1>
    %7 = vector.broadcast %6 : vector<1x256xi1> to vector<4x256xi1>
    %8 = vector.broadcast %cst_4 : f32 to vector<4x256xf32>
    %9 = arith.select %7, %2, %8 : vector<4x256xi1>, vector<4x256xf32>
    %c0_5 = arith.constant 0 : index
    %c0_6 = arith.constant 0 : index
    %c0_7 = arith.constant 0 : index
    %10 = vector.load %arg3[%c0_5, %c0_6, %c0_7] : memref<1x32x256xf32, #tpu.memory_space<vmem>>, vector<1x4x256xf32>
    %11 = vector.shape_cast %10 : vector<1x4x256xf32> to vector<4x256xf32>
    %12 = vector.shape_cast %9 : vector<4x256xf32> to vector<1x4x256xf32>
    tpu.vector_store %arg3[%c0_5, %c0_6, %c0_7], %12 {strides = array<i32>} : memref<1x32x256xf32, #tpu.memory_space<vmem>>, vector<1x4x256xf32>,
    %c0_8 = arith.constant 0 : index
    %c4 = arith.constant 4 : index
    %c0_9 = arith.constant 0 : index
    %13 = vector.load %arg1[%c0_8, %c4, %c0_9] : memref<1x32x256xf32, #tpu.memory_space<vmem>>, vector<1x4x256xf32>
    %14 = vector.shape_cast %13 : vector<1x4x256xf32> to vector<4x256xf32>
    %c240_i32 = arith.constant 240 : i32
    %15 = tpu.dynamic_rotate %14 by %c240_i32 dim 1 : vector<4x256xf32>, i32 -> vector<4x256xf32>
    %c1 = arith.constant 1 : index
    %c0_10 = arith.constant 0 : index
    %16 = vector.load %arg2[%c1, %c0_10] : memref<8x256xf32, #tpu.memory_space<vmem>>, vector<1x256xf32>
    %cst_11 = arith.constant 5.000000e-01 : f32
    %17 = vector.broadcast %cst_11 : f32 to vector<1x256xf32>
    %18 = arith.cmpf ogt, %16, %17 : vector<1x256xf32>
    %cst_12 = arith.constant 0.000000e+00 : f32
    %19 = vector.shape_cast %18 : vector<1x256xi1> to vector<1x256xi1>
    %20 = vector.broadcast %19 : vector<1x256xi1> to vector<4x256xi1>
    %21 = vector.broadcast %cst_12 : f32 to vector<4x256xf32>
    %22 = arith.select %20, %15, %21 : vector<4x256xi1>, vector<4x256xf32>
    %c0_13 = arith.constant 0 : index
    %c4_14 = arith.constant 4 : index
    %c0_15 = arith.constant 0 : index
    %23 = vector.load %arg3[%c0_13, %c4_14, %c0_15] : memref<1x32x256xf32, #tpu.memory_space<vmem>>, vector<1x4x256xf32>
    %24 = vector.shape_cast %23 : vector<1x4x256xf32> to vector<4x256xf32>
    %25 = vector.shape_cast %22 : vector<4x256xf32> to vector<1x4x256xf32>
    tpu.vector_store %arg3[%c0_13, %c4_14, %c0_15], %25 {strides = array<i32>} : memref<1x32x256xf32, #tpu.memory_space<vmem>>, vector<1x4x256xf32>,
    %c0_16 = arith.constant 0 : index
    %c8 = arith.constant 8 : index
    %c0_17 = arith.constant 0 : index
    %26 = vector.load %arg1[%c0_16, %c8, %c0_17] : memref<1x32x256xf32, #tpu.memory_space<vmem>>, vector<1x4x256xf32>
    %27 = vector.shape_cast %26 : vector<1x4x256xf32> to vector<4x256xf32>
    %c1_i32 = arith.constant 1 : i32
    %28 = tpu.dynamic_rotate %27 by %c1_i32 dim 1 : vector<4x256xf32>, i32 -> vector<4x256xf32>
    %c2 = arith.constant 2 : index
    %c0_18 = arith.constant 0 : index
    %29 = vector.load %arg2[%c2, %c0_18] : memref<8x256xf32, #tpu.memory_space<vmem>>, vector<1x256xf32>
    %cst_19 = arith.constant 5.000000e-01 : f32
    %30 = vector.broadcast %cst_19 : f32 to vector<1x256xf32>
    %31 = arith.cmpf ogt, %29, %30 : vector<1x256xf32>
    %cst_20 = arith.constant 0.000000e+00 : f32
    %32 = vector.shape_cast %31 : vector<1x256xi1> to vector<1x256xi1>
    %33 = vector.broadcast %32 : vector<1x256xi1> to vector<4x256xi1>
    %34 = vector.broadcast %cst_20 : f32 to vector<4x256xf32>
    %35 = arith.select %33, %28, %34 : vector<4x256xi1>, vector<4x256xf32>
    %c0_21 = arith.constant 0 : index
    %c8_22 = arith.constant 8 : index
    %c0_23 = arith.constant 0 : index
    %36 = vector.load %arg3[%c0_21, %c8_22, %c0_23] : memref<1x32x256xf32, #tpu.memory_space<vmem>>, vector<1x4x256xf32>
    %37 = vector.shape_cast %36 : vector<1x4x256xf32> to vector<4x256xf32>
    %38 = vector.shape_cast %35 : vector<4x256xf32> to vector<1x4x256xf32>
    tpu.vector_store %arg3[%c0_21, %c8_22, %c0_23], %38 {strides = array<i32>} : memref<1x32x256xf32, #tpu.memory_space<vmem>>, vector<1x4x256xf32>,
    %c0_24 = arith.constant 0 : index
    %c12 = arith.constant 12 : index
    %c0_25 = arith.constant 0 : index
    %39 = vector.load %arg1[%c0_24, %c12, %c0_25] : memref<1x32x256xf32, #tpu.memory_space<vmem>>, vector<1x4x256xf32>
    %40 = vector.shape_cast %39 : vector<1x4x256xf32> to vector<4x256xf32>
    %c255_i32 = arith.constant 255 : i32
    %41 = tpu.dynamic_rotate %40 by %c255_i32 dim 1 : vector<4x256xf32>, i32 -> vector<4x256xf32>
    %c3 = arith.constant 3 : index
    %c0_26 = arith.constant 0 : index
    %42 = vector.load %arg2[%c3, %c0_26] : memref<8x256xf32, #tpu.memory_space<vmem>>, vector<1x256xf32>
    %cst_27 = arith.constant 5.000000e-01 : f32
    %43 = vector.broadcast %cst_27 : f32 to vector<1x256xf32>
    %44 = arith.cmpf ogt, %42, %43 : vector<1x256xf32>
    %cst_28 = arith.constant 0.000000e+00 : f32
    %45 = vector.shape_cast %44 : vector<1x256xi1> to vector<1x256xi1>
    %46 = vector.broadcast %45 : vector<1x256xi1> to vector<4x256xi1>
    %47 = vector.broadcast %cst_28 : f32 to vector<4x256xf32>
    %48 = arith.select %46, %41, %47 : vector<4x256xi1>, vector<4x256xf32>
    %c0_29 = arith.constant 0 : index
    %c12_30 = arith.constant 12 : index
    %c0_31 = arith.constant 0 : index
    %49 = vector.load %arg3[%c0_29, %c12_30, %c0_31] : memref<1x32x256xf32, #tpu.memory_space<vmem>>, vector<1x4x256xf32>
    %50 = vector.shape_cast %49 : vector<1x4x256xf32> to vector<4x256xf32>
    %51 = vector.shape_cast %48 : vector<4x256xf32> to vector<1x4x256xf32>
    tpu.vector_store %arg3[%c0_29, %c12_30, %c0_31], %51 {strides = array<i32>} : memref<1x32x256xf32, #tpu.memory_space<vmem>>, vector<1x4x256xf32>,
    %c0_32 = arith.constant 0 : index
    %c16 = arith.constant 16 : index
    %c0_33 = arith.constant 0 : index
    %52 = vector.load %arg1[%c0_32, %c16, %c0_33] : memref<1x32x256xf32, #tpu.memory_space<vmem>>, vector<1x4x256xf32>
    %53 = vector.shape_cast %52 : vector<1x4x256xf32> to vector<4x256xf32>
    %c239_i32 = arith.constant 239 : i32
    %54 = tpu.dynamic_rotate %53 by %c239_i32 dim 1 : vector<4x256xf32>, i32 -> vector<4x256xf32>
    %c4_34 = arith.constant 4 : index
    %c0_35 = arith.constant 0 : index
    %55 = vector.load %arg2[%c4_34, %c0_35] : memref<8x256xf32, #tpu.memory_space<vmem>>, vector<1x256xf32>
    %cst_36 = arith.constant 5.000000e-01 : f32
    %56 = vector.broadcast %cst_36 : f32 to vector<1x256xf32>
    %57 = arith.cmpf ogt, %55, %56 : vector<1x256xf32>
    %cst_37 = arith.constant 0.000000e+00 : f32
    %58 = vector.shape_cast %57 : vector<1x256xi1> to vector<1x256xi1>
    %59 = vector.broadcast %58 : vector<1x256xi1> to vector<4x256xi1>
    %60 = vector.broadcast %cst_37 : f32 to vector<4x256xf32>
    %61 = arith.select %59, %54, %60 : vector<4x256xi1>, vector<4x256xf32>
    %c0_38 = arith.constant 0 : index
    %c16_39 = arith.constant 16 : index
    %c0_40 = arith.constant 0 : index
    %62 = vector.load %arg3[%c0_38, %c16_39, %c0_40] : memref<1x32x256xf32, #tpu.memory_space<vmem>>, vector<1x4x256xf32>
    %63 = vector.shape_cast %62 : vector<1x4x256xf32> to vector<4x256xf32>
    %64 = vector.shape_cast %61 : vector<4x256xf32> to vector<1x4x256xf32>
    tpu.vector_store %arg3[%c0_38, %c16_39, %c0_40], %64 {strides = array<i32>} : memref<1x32x256xf32, #tpu.memory_space<vmem>>, vector<1x4x256xf32>,
    %c0_41 = arith.constant 0 : index
    %c20 = arith.constant 20 : index
    %c0_42 = arith.constant 0 : index
    %65 = vector.load %arg1[%c0_41, %c20, %c0_42] : memref<1x32x256xf32, #tpu.memory_space<vmem>>, vector<1x4x256xf32>
    %66 = vector.shape_cast %65 : vector<1x4x256xf32> to vector<4x256xf32>
    %c241_i32 = arith.constant 241 : i32
    %67 = tpu.dynamic_rotate %66 by %c241_i32 dim 1 : vector<4x256xf32>, i32 -> vector<4x256xf32>
    %c5 = arith.constant 5 : index
    %c0_43 = arith.constant 0 : index
    %68 = vector.load %arg2[%c5, %c0_43] : memref<8x256xf32, #tpu.memory_space<vmem>>, vector<1x256xf32>
    %cst_44 = arith.constant 5.000000e-01 : f32
    %69 = vector.broadcast %cst_44 : f32 to vector<1x256xf32>
    %70 = arith.cmpf ogt, %68, %69 : vector<1x256xf32>
    %cst_45 = arith.constant 0.000000e+00 : f32
    %71 = vector.shape_cast %70 : vector<1x256xi1> to vector<1x256xi1>
    %72 = vector.broadcast %71 : vector<1x256xi1> to vector<4x256xi1>
    %73 = vector.broadcast %cst_45 : f32 to vector<4x256xf32>
    %74 = arith.select %72, %67, %73 : vector<4x256xi1>, vector<4x256xf32>
    %c0_46 = arith.constant 0 : index
    %c20_47 = arith.constant 20 : index
    %c0_48 = arith.constant 0 : index
    %75 = vector.load %arg3[%c0_46, %c20_47, %c0_48] : memref<1x32x256xf32, #tpu.memory_space<vmem>>, vector<1x4x256xf32>
    %76 = vector.shape_cast %75 : vector<1x4x256xf32> to vector<4x256xf32>
    %77 = vector.shape_cast %74 : vector<4x256xf32> to vector<1x4x256xf32>
    tpu.vector_store %arg3[%c0_46, %c20_47, %c0_48], %77 {strides = array<i32>} : memref<1x32x256xf32, #tpu.memory_space<vmem>>, vector<1x4x256xf32>,
    %c0_49 = arith.constant 0 : index
    %c24 = arith.constant 24 : index
    %c0_50 = arith.constant 0 : index
    %78 = vector.load %arg1[%c0_49, %c24, %c0_50] : memref<1x32x256xf32, #tpu.memory_space<vmem>>, vector<1x4x256xf32>
    %79 = vector.shape_cast %78 : vector<1x4x256xf32> to vector<4x256xf32>
    %c15_i32 = arith.constant 15 : i32
    %80 = tpu.dynamic_rotate %79 by %c15_i32 dim 1 : vector<4x256xf32>, i32 -> vector<4x256xf32>
    %c6 = arith.constant 6 : index
    %c0_51 = arith.constant 0 : index
    %81 = vector.load %arg2[%c6, %c0_51] : memref<8x256xf32, #tpu.memory_space<vmem>>, vector<1x256xf32>
    %cst_52 = arith.constant 5.000000e-01 : f32
    %82 = vector.broadcast %cst_52 : f32 to vector<1x256xf32>
    %83 = arith.cmpf ogt, %81, %82 : vector<1x256xf32>
    %cst_53 = arith.constant 0.000000e+00 : f32
    %84 = vector.shape_cast %83 : vector<1x256xi1> to vector<1x256xi1>
    %85 = vector.broadcast %84 : vector<1x256xi1> to vector<4x256xi1>
    %86 = vector.broadcast %cst_53 : f32 to vector<4x256xf32>
    %87 = arith.select %85, %80, %86 : vector<4x256xi1>, vector<4x256xf32>
    %c0_54 = arith.constant 0 : index
    %c24_55 = arith.constant 24 : index
    %c0_56 = arith.constant 0 : index
    %88 = vector.load %arg3[%c0_54, %c24_55, %c0_56] : memref<1x32x256xf32, #tpu.memory_space<vmem>>, vector<1x4x256xf32>
    %89 = vector.shape_cast %88 : vector<1x4x256xf32> to vector<4x256xf32>
    %90 = vector.shape_cast %87 : vector<4x256xf32> to vector<1x4x256xf32>
    tpu.vector_store %arg3[%c0_54, %c24_55, %c0_56], %90 {strides = array<i32>} : memref<1x32x256xf32, #tpu.memory_space<vmem>>, vector<1x4x256xf32>,
    %c0_57 = arith.constant 0 : index
    %c28 = arith.constant 28 : index
    %c0_58 = arith.constant 0 : index
    %91 = vector.load %arg1[%c0_57, %c28, %c0_58] : memref<1x32x256xf32, #tpu.memory_space<vmem>>, vector<1x4x256xf32>
    %92 = vector.shape_cast %91 : vector<1x4x256xf32> to vector<4x256xf32>
    %c17_i32 = arith.constant 17 : i32
    %93 = tpu.dynamic_rotate %92 by %c17_i32 dim 1 : vector<4x256xf32>, i32 -> vector<4x256xf32>
    %c7 = arith.constant 7 : index
    %c0_59 = arith.constant 0 : index
    %94 = vector.load %arg2[%c7, %c0_59] : memref<8x256xf32, #tpu.memory_space<vmem>>, vector<1x256xf32>
    %cst_60 = arith.constant 5.000000e-01 : f32
    %95 = vector.broadcast %cst_60 : f32 to vector<1x256xf32>
    %96 = arith.cmpf ogt, %94, %95 : vector<1x256xf32>
    %cst_61 = arith.constant 0.000000e+00 : f32
    %97 = vector.shape_cast %96 : vector<1x256xi1> to vector<1x256xi1>
    %98 = vector.broadcast %97 : vector<1x256xi1> to vector<4x256xi1>
    %99 = vector.broadcast %cst_61 : f32 to vector<4x256xf32>
    %100 = arith.select %98, %93, %99 : vector<4x256xi1>, vector<4x256xf32>
    %c0_62 = arith.constant 0 : index
    %c28_63 = arith.constant 28 : index
    %c0_64 = arith.constant 0 : index
    %101 = vector.load %arg3[%c0_62, %c28_63, %c0_64] : memref<1x32x256xf32, #tpu.memory_space<vmem>>, vector<1x4x256xf32>
    %102 = vector.shape_cast %101 : vector<1x4x256xf32> to vector<4x256xf32>
    %103 = vector.shape_cast %100 : vector<4x256xf32> to vector<1x4x256xf32>
    tpu.vector_store %arg3[%c0_62, %c28_63, %c0_64], %103 {strides = array<i32>} : memref<1x32x256xf32, #tpu.memory_space<vmem>>, vector<1x4x256xf32>,
    return
  }
  func.func @transform_0(%arg0: i32) -> (i32, i32, i32) {
    %c0_i32 = arith.constant 0 : i32
    %c0_i32_0 = arith.constant 0 : i32
    %c0_i32_1 = arith.constant 0 : i32
    return %arg0, %c0_i32, %c0_i32_0 : i32, i32, i32
  }
  func.func @transform_1(%arg0: i32) -> (i32, i32) {
    %c0_i32 = arith.constant 0 : i32
    %c0_i32_0 = arith.constant 0 : i32
    %c0_i32_1 = arith.constant 0 : i32
    return %c0_i32, %c0_i32_0 : i32, i32
  }
  func.func @transform_2(%arg0: i32) -> (i32, i32, i32) {
    %c0_i32 = arith.constant 0 : i32
    %c0_i32_0 = arith.constant 0 : i32
    %c0_i32_1 = arith.constant 0 : i32
    return %arg0, %c0_i32, %c0_i32_0 : i32, i32, i32
  }
}

</mosaic_0001>

<llo_original>
// kernel: tpu_custom_call.1
$region0: #{tpu_custom_call.1}
  #allocation0 [shape = 'u32[]', space=smem, size = 0x4, offset = 0x4, fixed_abs, tag = 'smem constant byte address 0x4 - core index']
  #allocation1 [shape = 'u32[144,128]{1,0:T(1,128)}', space=vmem, size = 0x12000, scoped, tag = 'internal scratch']
  %s0 = inlined_call_operand.hbm [shape: f32[2,32,256], index: 0, kind: input, shape index: {}]
  %s1 = inlined_call_operand.hbm [shape: f32[8,256], index: 1, kind: input, shape index: {}]
  %s2 = inlined_call_operand.hbm [shape: f32[2,32,256], index: 2, kind: output, shape index: {}]
  %s3 = sld [smem:[#allocation0]]
  $region49: #{tpu_custom_call.1} parent=0
    _
  %s5 = ssub.s32 1, %s3
  %s6 = scalar_select 0, %s5, %s3
  $region1: #{tpu_custom_call.1} parent=0
    #allocation2 [shape = 'u8[65536]{0}', space=vmem, size = 0x10000, scoped, tag = 'input window, operand 0']
    #allocation3 [shape = 's32[2]{0}', space=sflag, size = 0x8, scoped, tag = 'scoped memory for tpu_custom_call.1']
    #allocation4 [shape = 's32[2]{0}', space=sflag, size = 0x8, scoped, tag = 'scoped memory for tpu_custom_call.1']
    #allocation5 [shape = 'u8[8192]{0}', space=vmem, size = 0x2000, scoped, tag = 'input window, operand 1, single buffered']
    #allocation6 [shape = 's32[1]{0}', space=sflag, size = 0x4, scoped, tag = 'scoped memory for tpu_custom_call.1']
    #allocation7 [shape = 'u8[65536]{0}', space=vmem, size = 0x10000, scoped, tag = 'output window, operand 0']
    %7 = vsyncpa [#allocation3], 0
    %s8 = scalar_lea.sflag [#allocation3], 1
    %9 = vsyncpa %s8, 0
    %10 = vsyncpa [#allocation6], 0
    %11 = vsyncpa [#allocation4], 0
    %s12 = scalar_lea.sflag [#allocation4], 1
    %13 = vsyncpa %s12, 0
    loop: start=0, step=1, limit=4
    $region2: #{tpu_custom_call.1} parent=1 // loop_pre_header
      _
    $region3: #{tpu_custom_call.1} parent=1 // loop_header
      %s15 = sphi 0, %s19
      %p16 = scmp.ge.s32.totalorder %s15, 4
      %s25 = sphi 0, %s27
      %s28 = sphi 0, %s25
      %s29 = sphi 0, %s28
      %s45 = sphi 0, %s29
      %s49 = sphi 0, %s49
      %s51 = sphi 0, %s49
      %s52 = sphi 0, %s51
      %s66 = sphi 0, %s52
      %s72 = sphi 0, %s74
      %s75 = sphi 0, %s72
      %s76 = sphi 0, %s75
      %s92 = sphi 0, %s76
    $region4: #{tpu_custom_call.1} parent=1 // loop_header_branch
      %18 = sbr.rel (%p16) target = $region8
    $region5: #{tpu_custom_call.1} parent=1 // loop_body
      %s20 = ssub.s32 %s15, 1
      %s21 = ssub.s32 %s15, 2
      %s22 = sadd.s32 %s15, 1
      %s23 = ssub.s32 %s15, %s22
      %p24 = scmp.eq.s32.totalorder %s23, 0
      %s26 = sadd.s32 %s25, 1
      %s27 = scalar_select %p24, %s25, %s26
      %p30 = pneg %p24
      %p31 = scmp.eq.s32.totalorder %s15, 1
      %p32 = por %p30, %p31
      %p33 = scmp.ne.s32.totalorder %s25, %s28
      %p34 = scmp.eq.s32.totalorder %s15, 0
      %p35 = por %p33, %p34
      %p36 = scmp.ne.s32.totalorder %s25, %s28
      %p37 = scmp.eq.s32.totalorder %s20, 1
      %p38 = por %p36, %p37
      %p39 = scmp.ne.s32.totalorder %s28, %s29
      %p40 = scmp.eq.s32.totalorder %s20, 0
      %p41 = por %p39, %p40
      %p42 = scmp.ne.s32.totalorder %s28, %s29
      %p43 = scmp.eq.s32.totalorder %s21, 1
      %p44 = por %p42, %p43
      %p46 = scmp.ne.s32.totalorder %s29, %s45
      %p47 = scmp.eq.s32.totalorder %s21, 0
      %p48 = por %p46, %p47
      %s50 = sadd.s32 %s49, 1
      %p53 = scmp.eq.s32.totalorder %s15, 1
      %p54 = scmp.ne.s32.totalorder %s49, %s51
      %p55 = scmp.eq.s32.totalorder %s15, 0
      %p56 = por %p54, %p55
      %p57 = scmp.ne.s32.totalorder %s49, %s51
      %p58 = scmp.eq.s32.totalorder %s20, 1
      %p59 = por %p57, %p58
      %p60 = scmp.ne.s32.totalorder %s51, %s52
      %p61 = scmp.eq.s32.totalorder %s20, 0
      %p62 = por %p60, %p61
      %p63 = scmp.ne.s32.totalorder %s51, %s52
      %p64 = scmp.eq.s32.totalorder %s21, 1
      %p65 = por %p63, %p64
      %p67 = scmp.ne.s32.totalorder %s52, %s66
      %p68 = scmp.eq.s32.totalorder %s21, 0
      %p69 = por %p67, %p68
      %s70 = ssub.s32 %s15, %s22
      %p71 = scmp.eq.s32.totalorder %s70, 0
      %s73 = sadd.s32 %s72, 1
      %s74 = scalar_select %p71, %s72, %s73
      %p77 = pneg %p71
      %p78 = scmp.eq.s32.totalorder %s15, 1
      %p79 = por %p77, %p78
      %p80 = scmp.ne.s32.totalorder %s72, %s75
      %p81 = scmp.eq.s32.totalorder %s15, 0
      %p82 = por %p80, %p81
      %p83 = scmp.ne.s32.totalorder %s72, %s75
      %p84 = scmp.eq.s32.totalorder %s20, 1
      %p85 = por %p83, %p84
      %p86 = scmp.ne.s32.totalorder %s75, %s76
      %p87 = scmp.eq.s32.totalorder %s20, 0
      %p88 = por %p86, %p87
      %p89 = scmp.ne.s32.totalorder %s75, %s76
      %p90 = scmp.eq.s32.totalorder %s21, 1
      %p91 = por %p89, %p90
      %p93 = scmp.ne.s32.totalorder %s76, %s92
      %p94 = scmp.eq.s32.totalorder %s21, 0
      %p95 = por %p93, %p94
      %p96 = scmp.le.s32.totalorder 1, %s15
      %p97 = scmp.lt.s32.totalorder %s15, 3
      %p98 = pnand %p96, %p97
      %p99 = pneg %p98
      // Predicated region
      $region9: #{tpu_custom_call.1} parent=5 // pred_check
        _
      $region10: #{tpu_custom_call.1} parent=5 // pred_check_branch
        %101 = sbr.rel (%p98) target = $region12
      $region11: #{tpu_custom_call.1} parent=5 // pred_region
        %s102 = ssub.s32 %s15, 1
        // Predicated region
        $region13: #{tpu_custom_call.1} parent=11 // pred_check
          %p103 = pneg %p62
        $region14: #{tpu_custom_call.1} parent=11 // pred_check_branch
          %105 = sbr.rel (%p103) target = $region16
        $region15: #{tpu_custom_call.1} parent=11 // pred_region
          %s107 = ssub.s32 256, 256
          %108 = vsyncadd [#allocation6], %s107
          %s110 = sshll.u32 [#allocation5], 4
          %s111 = int_to_ptr.vmem [resolvable:$true] %s110
          %113 = dma.hbm_to_vmem [thread:$0]  %s1, 256, %s111, [#allocation6]
        $region16: #{tpu_custom_call.1} parent=11 // pred_fallthru
          _
      $region12: #{tpu_custom_call.1} parent=5 // pred_fallthru
        _
      %p114 = scmp.lt.s32.totalorder %s15, 2
      // Predicated region
      $region17: #{tpu_custom_call.1} parent=5 // pred_check
        %p115 = pneg %p114
      $region18: #{tpu_custom_call.1} parent=5 // pred_check_branch
        %117 = sbr.rel (%p115) target = $region20
      $region19: #{tpu_custom_call.1} parent=5 // pred_region
        // Predicated region
        $region21: #{tpu_custom_call.1} parent=19 // pred_check
          %p118 = pneg %p35
        $region22: #{tpu_custom_call.1} parent=19 // pred_check_branch
          %120 = sbr.rel (%p118) target = $region24
        $region23: #{tpu_custom_call.1} parent=19 // pred_region
          %s121 = sand.u32 %s25, 1
          %s122 = scalar_lea.sflag [#allocation3], %s121
          %s123 = sand.u32 %s25, 1
          %s124 = smul.addr %s123, 64
          %s125 = scalar_lea.vmem [#allocation2], %s124
          %s127 = ssub.s32 1024, 1024
          %128 = vsyncadd %s122, %s127
          %s129 = smul.addr %s15, 8
          %s130 = smul.addr %s129, 128
          %s131 = scalar_lea.hbm %s0, %s130
          %s132 = sshll.u32 %s125, 4
          %s133 = int_to_ptr.vmem [resolvable:$true] %s132
          %138 = dma.hbm_to_vmem [thread:$0]  %s131, 1024, %s133, %s122, 256, 256, 16
        $region24: #{tpu_custom_call.1} parent=19 // pred_fallthru
          _
      $region20: #{tpu_custom_call.1} parent=5 // pred_fallthru
        _
      %p139 = scmp.le.s32.totalorder 1, %s15
      %p140 = scmp.lt.s32.totalorder %s15, 3
      %p141 = pnand %p139, %p140
      %p142 = pneg %p141
      // Predicated region
      $region25: #{tpu_custom_call.1} parent=5 // pred_check
        _
      $region26: #{tpu_custom_call.1} parent=5 // pred_check_branch
        %144 = sbr.rel (%p141) target = $region28
      $region27: #{tpu_custom_call.1} parent=5 // pred_region
        %s145 = ssub.s32 %s15, 1
        %s146 = sand.u32 %s28, 1
        %s147 = scalar_lea.sflag [#allocation3], %s146
        %s148 = sand.u32 %s28, 1
        %s149 = smul.addr %s148, 64
        %s150 = scalar_lea.vmem [#allocation2], %s149
        // Predicated region
        $region29: #{tpu_custom_call.1} parent=27 // pred_check
          %p151 = pneg %p41
        $region30: #{tpu_custom_call.1} parent=27 // pred_check_branch
          %153 = sbr.rel (%p151) target = $region32
        $region31: #{tpu_custom_call.1} parent=27 // pred_region
          %154 = dma.done %s147, 1024
        $region32: #{tpu_custom_call.1} parent=27 // pred_fallthru
          _
        // Predicated region
        $region33: #{tpu_custom_call.1} parent=27 // pred_check
          %p155 = pneg %p62
        $region34: #{tpu_custom_call.1} parent=27 // pred_check_branch
          %157 = sbr.rel (%p155) target = $region36
        $region35: #{tpu_custom_call.1} parent=27 // pred_region
          %158 = dma.done [#allocation6], 256
        $region36: #{tpu_custom_call.1} parent=27 // pred_fallthru
          _
        %s159 = sand.u32 %s28, 1
        %s160 = scalar_lea.sflag [#allocation3], %s159
        %s161 = sand.u32 %s28, 1
        %s162 = smul.addr %s161, 64
        %s163 = scalar_lea.vmem [#allocation2], %s162
        %p164 = pneg %p41
        %p165 = pneg %p38
        %p166 = pneg %p62
        %p167 = pneg %p59
        %p168 = pneg %p88
        %p169 = pneg %p85
        %s170 = sand.u32 %s75, 1
        %s171 = scalar_lea.sflag [#allocation4], %s170
        %s172 = sand.u32 %s75, 1
        %s173 = smul.addr %s172, 64
        %s174 = scalar_lea.vmem [#allocation7], %s173
        %v175 = vld [vmem:[%s150] sm:$0xf]
        %v176 = vld [vmem:[%s150 + $0x8] sm:$0xf]
        %177 = vrot.lane.b32.xlu0 %v175, 16
        %v178 = vpop.permute.xlu0 %177
        %179 = vrot.lane.b32.xlu0 %v176, 16
        %v180 = vpop.permute.xlu0 %179
        %v181 = vlaneseq
        %v182 = vand.u32 %v181, 127
        %vm183 = vcmp.lt.s32.totalorder %v182, 16
        %v184 = vsel %vm183, %v178, %v180
        %v185 = vsel %vm183, %v180, %v178
        %v186 = vld [vmem:[#allocation5] ss:$8 sm:$0x3]
        %vm187 = vcmp.gt.f32.partialorder %v186, 0.5
        %v188 = vsel %vm187, 1, 0
        %v189 = vlaneseq
        %v190 = vshrl.u32 %v189, 7
        %v191 = vsub.s32 0, %v190
        %v192 = vrot.slane %v188, %v191
        %v193 = vlaneseq
        %v194 = vshrl.u32 %v193, 7
        %v195 = vsub.s32 1, %v194
        %v196 = vrot.slane %v188, %v195
        %vm197 = vcmp.eq.s32.totalorder %v192, 1
        %vm198 = vcmp.eq.s32.totalorder %v196, 1
        %v199 = vsel %vm197, %v185, 0.0
        %v200 = vsel %vm198, %v184, 0.0
        %201 = vst [vmem:[%s174] sm:$0xf] %v199
        %202 = vst [vmem:[%s174 + $0x8] sm:$0xf] %v200
        %v203 = vld [vmem:[%s150] sm:$0xf0]
        %v204 = vld [vmem:[%s150 + $0x8] sm:$0xf0]
        %v207 = vrot.slane %v203, 4
        %v208 = vrot.slane %v204, 4
        %211 = vrot.lane.b32.xlu0 %v207, 112
        %v212 = vpop.permute.xlu0 %211
        %213 = vrot.lane.b32.xlu0 %v208, 112
        %v214 = vpop.permute.xlu0 %213
        %vm215 = vcmp.lt.s32.totalorder %v182, 112
        %v216 = vsel %vm215, %v212, %v214
        %v217 = vsel %vm215, %v214, %v212
        %s218 = scalar_lea.vmem [#allocation5], 1
        %v219 = vld [vmem:[%s218] ss:$8 sm:$0x3]
        %vm220 = vcmp.gt.f32.partialorder %v219, 0.5
        %v221 = vsel %vm220, 1, 0
        %v222 = vlaneseq
        %v223 = vshrl.u32 %v222, 7
        %v224 = vsub.s32 0, %v223
        %v225 = vrot.slane %v221, %v224
        %v226 = vlaneseq
        %v227 = vshrl.u32 %v226, 7
        %v228 = vsub.s32 1, %v227
        %v229 = vrot.slane %v221, %v228
        %vm230 = vcmp.eq.s32.totalorder %v225, 1
        %vm231 = vcmp.eq.s32.totalorder %v229, 1
        %v232 = vsel %vm230, %v216, 0.0
        %v233 = vsel %vm231, %v217, 0.0
        %v236 = vrot.slane %v232, 4
        %v237 = vrot.slane %v233, 4
        %240 = vst [vmem:[%s174] sm:$0xf0] %v236
        %241 = vst [vmem:[%s174 + $0x8] sm:$0xf0] %v237
        %v242 = vld [vmem:[%s150 + $0x10] sm:$0xf]
        %v243 = vld [vmem:[%s150 + $0x18] sm:$0xf]
        %244 = vrot.lane.b32.xlu0 %v242, 1
        %v245 = vpop.permute.xlu0 %244
        %246 = vrot.lane.b32.xlu0 %v243, 1
        %v247 = vpop.permute.xlu0 %246
        %vm248 = vcmp.lt.s32.totalorder %v182, 1
        %v249 = vsel %vm248, %v245, %v247
        %v250 = vsel %vm248, %v247, %v245
        %s251 = scalar_lea.vmem [#allocation5], 2
        %v252 = vld [vmem:[%s251] ss:$8 sm:$0x3]
        %vm253 = vcmp.gt.f32.partialorder %v252, 0.5
        %v254 = vsel %vm253, 1, 0
        %v255 = vlaneseq
        %v256 = vshrl.u32 %v255, 7
        %v257 = vsub.s32 0, %v256
        %v258 = vrot.slane %v254, %v257
        %v259 = vlaneseq
        %v260 = vshrl.u32 %v259, 7
        %v261 = vsub.s32 1, %v260
        %v262 = vrot.slane %v254, %v261
        %vm263 = vcmp.eq.s32.totalorder %v258, 1
        %vm264 = vcmp.eq.s32.totalorder %v262, 1
        %v265 = vsel %vm263, %v250, 0.0
        %v266 = vsel %vm264, %v249, 0.0
        %267 = vst [vmem:[%s174 + $0x10] sm:$0xf] %v265
        %268 = vst [vmem:[%s174 + $0x18] sm:$0xf] %v266
        %v269 = vld [vmem:[%s150 + $0x10] sm:$0xf0]
        %v270 = vld [vmem:[%s150 + $0x18] sm:$0xf0]
        %v273 = vrot.slane %v269, 4
        %v274 = vrot.slane %v270, 4
        %277 = vrot.lane.b32.xlu0 %v273, 127
        %v278 = vpop.permute.xlu0 %277
        %279 = vrot.lane.b32.xlu0 %v274, 127
        %v280 = vpop.permute.xlu0 %279
        %vm281 = vcmp.lt.s32.totalorder %v182, 127
        %v282 = vsel %vm281, %v278, %v280
        %v283 = vsel %vm281, %v280, %v278
        %s284 = scalar_lea.vmem [#allocation5], 3
        %v285 = vld [vmem:[%s284] ss:$8 sm:$0x3]
        %vm286 = vcmp.gt.f32.partialorder %v285, 0.5
        %v287 = vsel %vm286, 1, 0
        %v288 = vlaneseq
        %v289 = vshrl.u32 %v288, 7
        %v290 = vsub.s32 0, %v289
        %v291 = vrot.slane %v287, %v290
        %v292 = vlaneseq
        %v293 = vshrl.u32 %v292, 7
        %v294 = vsub.s32 1, %v293
        %v295 = vrot.slane %v287, %v294
        %vm296 = vcmp.eq.s32.totalorder %v291, 1
        %vm297 = vcmp.eq.s32.totalorder %v295, 1
        %v298 = vsel %vm296, %v282, 0.0
        %v299 = vsel %vm297, %v283, 0.0
        %v302 = vrot.slane %v298, 4
        %v303 = vrot.slane %v299, 4
        %306 = vst [vmem:[%s174 + $0x10] sm:$0xf0] %v302
        %307 = vst [vmem:[%s174 + $0x18] sm:$0xf0] %v303
        %v308 = vld [vmem:[%s150 + $0x20] sm:$0xf]
        %v309 = vld [vmem:[%s150 + $0x28] sm:$0xf]
        %310 = vrot.lane.b32.xlu0 %v308, 111
        %v311 = vpop.permute.xlu0 %310
        %312 = vrot.lane.b32.xlu0 %v309, 111
        %v313 = vpop.permute.xlu0 %312
        %vm314 = vcmp.lt.s32.totalorder %v182, 111
        %v315 = vsel %vm314, %v311, %v313
        %v316 = vsel %vm314, %v313, %v311
        %s317 = scalar_lea.vmem [#allocation5], 4
        %v318 = vld [vmem:[%s317] ss:$8 sm:$0x3]
        %vm319 = vcmp.gt.f32.partialorder %v318, 0.5
        %v320 = vsel %vm319, 1, 0
        %v321 = vlaneseq
        %v322 = vshrl.u32 %v321, 7
        %v323 = vsub.s32 0, %v322
        %v324 = vrot.slane %v320, %v323
        %v325 = vlaneseq
        %v326 = vshrl.u32 %v325, 7
        %v327 = vsub.s32 1, %v326
        %v328 = vrot.slane %v320, %v327
        %vm329 = vcmp.eq.s32.totalorder %v324, 1
        %vm330 = vcmp.eq.s32.totalorder %v328, 1
        %v331 = vsel %vm329, %v315, 0.0
        %v332 = vsel %vm330, %v316, 0.0
        %333 = vst [vmem:[%s174 + $0x20] sm:$0xf] %v331
        %334 = vst [vmem:[%s174 + $0x28] sm:$0xf] %v332
        %v335 = vld [vmem:[%s150 + $0x20] sm:$0xf0]
        %v336 = vld [vmem:[%s150 + $0x28] sm:$0xf0]
        %v339 = vrot.slane %v335, 4
        %v340 = vrot.slane %v336, 4
        %343 = vrot.lane.b32.xlu0 %v339, 113
        %v344 = vpop.permute.xlu0 %343
        %345 = vrot.lane.b32.xlu0 %v340, 113
        %v346 = vpop.permute.xlu0 %345
        %vm347 = vcmp.lt.s32.totalorder %v182, 113
        %v348 = vsel %vm347, %v344, %v346
        %v349 = vsel %vm347, %v346, %v344
        %s350 = scalar_lea.vmem [#allocation5], 5
        %v351 = vld [vmem:[%s350] ss:$8 sm:$0x3]
        %vm352 = vcmp.gt.f32.partialorder %v351, 0.5
        %v353 = vsel %vm352, 1, 0
        %v354 = vlaneseq
        %v355 = vshrl.u32 %v354, 7
        %v356 = vsub.s32 0, %v355
        %v357 = vrot.slane %v353, %v356
        %v358 = vlaneseq
        %v359 = vshrl.u32 %v358, 7
        %v360 = vsub.s32 1, %v359
        %v361 = vrot.slane %v353, %v360
        %vm362 = vcmp.eq.s32.totalorder %v357, 1
        %vm363 = vcmp.eq.s32.totalorder %v361, 1
        %v364 = vsel %vm362, %v348, 0.0
        %v365 = vsel %vm363, %v349, 0.0
        %v368 = vrot.slane %v364, 4
        %v369 = vrot.slane %v365, 4
        %372 = vst [vmem:[%s174 + $0x20] sm:$0xf0] %v368
        %373 = vst [vmem:[%s174 + $0x28] sm:$0xf0] %v369
        %v374 = vld [vmem:[%s150 + $0x30] sm:$0xf]
        %v375 = vld [vmem:[%s150 + $0x38] sm:$0xf]
        %376 = vrot.lane.b32.xlu0 %v374, 15
        %v377 = vpop.permute.xlu0 %376
        %378 = vrot.lane.b32.xlu0 %v375, 15
        %v379 = vpop.permute.xlu0 %378
        %vm380 = vcmp.lt.s32.totalorder %v182, 15
        %v381 = vsel %vm380, %v377, %v379
        %v382 = vsel %vm380, %v379, %v377
        %s383 = scalar_lea.vmem [#allocation5], 6
        %v384 = vld [vmem:[%s383] ss:$8 sm:$0x3]
        %vm385 = vcmp.gt.f32.partialorder %v384, 0.5
        %v386 = vsel %vm385, 1, 0
        %v387 = vlaneseq
        %v388 = vshrl.u32 %v387, 7
        %v389 = vsub.s32 0, %v388
        %v390 = vrot.slane %v386, %v389
        %v391 = vlaneseq
        %v392 = vshrl.u32 %v391, 7
        %v393 = vsub.s32 1, %v392
        %v394 = vrot.slane %v386, %v393
        %vm395 = vcmp.eq.s32.totalorder %v390, 1
        %vm396 = vcmp.eq.s32.totalorder %v394, 1
        %v397 = vsel %vm395, %v382, 0.0
        %v398 = vsel %vm396, %v381, 0.0
        %399 = vst [vmem:[%s174 + $0x30] sm:$0xf] %v397
        %400 = vst [vmem:[%s174 + $0x38] sm:$0xf] %v398
        %v401 = vld [vmem:[%s150 + $0x30] sm:$0xf0]
        %v402 = vld [vmem:[%s150 + $0x38] sm:$0xf0]
        %v405 = vrot.slane %v401, 4
        %v406 = vrot.slane %v402, 4
        %409 = vrot.lane.b32.xlu0 %v405, 17
        %v410 = vpop.permute.xlu0 %409
        %411 = vrot.lane.b32.xlu0 %v406, 17
        %v412 = vpop.permute.xlu0 %411
        %vm413 = vcmp.lt.s32.totalorder %v182, 17
        %v414 = vsel %vm413, %v410, %v412
        %v415 = vsel %vm413, %v412, %v410
        %s416 = scalar_lea.vmem [#allocation5], 7
        %v417 = vld [vmem:[%s416] ss:$8 sm:$0x3]
        %vm418 = vcmp.gt.f32.partialorder %v417, 0.5
        %v419 = vsel %vm418, 1, 0
        %v420 = vlaneseq
        %v421 = vshrl.u32 %v420, 7
        %v422 = vsub.s32 0, %v421
        %v423 = vrot.slane %v419, %v422
        %v424 = vlaneseq
        %v425 = vshrl.u32 %v424, 7
        %v426 = vsub.s32 1, %v425
        %v427 = vrot.slane %v419, %v426
        %vm428 = vcmp.eq.s32.totalorder %v423, 1
        %vm429 = vcmp.eq.s32.totalorder %v427, 1
        %v430 = vsel %vm428, %v415, 0.0
        %v431 = vsel %vm429, %v414, 0.0
        %v434 = vrot.slane %v430, 4
        %v435 = vrot.slane %v431, 4
        %438 = vst [vmem:[%s174 + $0x30] sm:$0xf0] %v434
        %439 = vst [vmem:[%s174 + $0x38] sm:$0xf0] %v435
        %s440 = sand.u32 %s75, 1
        %s441 = scalar_lea.sflag [#allocation4], %s440
        %s442 = sand.u32 %s75, 1
        %s443 = smul.addr %s442, 64
        %s444 = scalar_lea.vmem [#allocation7], %s443
        // Predicated region
        $region37: #{tpu_custom_call.1} parent=27 // pred_check
          %p445 = pneg %p85
        $region38: #{tpu_custom_call.1} parent=27 // pred_check_branch
          %447 = sbr.rel (%p445) target = $region40
        $region39: #{tpu_custom_call.1} parent=27 // pred_region
          %s449 = ssub.s32 1024, 1024
          %450 = vsyncadd %s441, %s449
          %s451 = smul.addr %s20, 8
          %s452 = smul.addr %s451, 128
          %s453 = scalar_lea.hbm %s2, %s452
          %s454 = sshll.u32 %s444, 4
          %s455 = int_to_ptr.vmem [resolvable:$true] %s454
          %460 = dma.vmem_to_hbm [thread:$0]  %s455, 1024, %s453, %s441, 256, 256, 16
        $region40: #{tpu_custom_call.1} parent=27 // pred_fallthru
          _
      $region28: #{tpu_custom_call.1} parent=5 // pred_fallthru
        _
      %p461 = scmp.le.s32.totalorder 2, %s15
      // Predicated region
      $region41: #{tpu_custom_call.1} parent=5 // pred_check
        %p462 = pneg %p461
      $region42: #{tpu_custom_call.1} parent=5 // pred_check_branch
        %464 = sbr.rel (%p462) target = $region44
      $region43: #{tpu_custom_call.1} parent=5 // pred_region
        %s465 = ssub.s32 %s15, 2
        // Predicated region
        $region45: #{tpu_custom_call.1} parent=43 // pred_check
          %p466 = pneg %p91
        $region46: #{tpu_custom_call.1} parent=43 // pred_check_branch
          %468 = sbr.rel (%p466) target = $region48
        $region47: #{tpu_custom_call.1} parent=43 // pred_region
          %s469 = sand.u32 %s76, 1
          %s470 = scalar_lea.sflag [#allocation4], %s469
          %s471 = sand.u32 %s76, 1
          %s472 = smul.addr %s471, 64
          %s473 = scalar_lea.vmem [#allocation7], %s472
          %474 = dma.done %s470, 1024
        $region48: #{tpu_custom_call.1} parent=43 // pred_fallthru
          _
      $region44: #{tpu_custom_call.1} parent=5 // pred_fallthru
        _
    $region6: #{tpu_custom_call.1} parent=1 // loop_footer
      %s19 = sadd.s32 1, %s15
    $region7: #{tpu_custom_call.1} parent=1 // loop_footer_branch
      %14 = sbr.rel target = $region3
    $region8: #{tpu_custom_call.1} parent=1 // loop_exit
      _
    %475 = vsyncpa [#allocation3], 1
    %s476 = scalar_lea.sflag [#allocation3], 1
    %477 = vsyncpa %s476, 1
    %478 = vsyncpa [#allocation6], 1
    %479 = vsyncpa [#allocation4], 1
    %s480 = scalar_lea.sflag [#allocation4], 1
    %481 = vsyncpa %s480, 1

</llo_original>
